<compile_context>
chip_gen: v7x
topology: tpu7x:2x2x1
jax: 0.10.0
libtpu: 0.0.40
codegen_flags: <defaults>
</compile_context>

<pallas_src>
import functools

import jax
import jax.numpy as jnp
from jax.experimental import pallas as pl
from jax.experimental.pallas import tpu as pltpu


# ---------------------------------------------------------------------------
# Kernels
# ---------------------------------------------------------------------------

def _se_single_pass_kernel(x_ref, w1t_ref, b1_ref, w2t_ref, b2_ref, o_ref):
    # x_ref/o_ref: (Bb, C, L); w1t: (C, H); b1: (1, H); w2t: (H, C); b2: (1, C)
    x = x_ref[...]                                            # native dtype
    # Squeeze: mean over L (XLU lane reduction), f32 accumulation (tiny).
    pooled = jnp.mean(x.astype(jnp.float32), axis=-1)         # (Bb, C)
    # Excitation: fc1 (1x1 conv == matmul) + ReLU, fc2 + sigmoid, all f32.
    h = jnp.dot(pooled, w1t_ref[...],
                preferred_element_type=jnp.float32) + b1_ref[...]   # (Bb, H)
    h = jnp.maximum(h, 0.0)
    g = jnp.dot(h, w2t_ref[...],
                preferred_element_type=jnp.float32) + b2_ref[...]   # (Bb, C)
    g = jax.nn.sigmoid(g)
    # Scale: cast the tiny gate once, broadcast over L, lane-dense store.
    o_ref[...] = x * g.astype(x.dtype)[:, :, None]


def _se_pool_sum_kernel(x_ref, sum_ref, *, seq_len, tile_len):
    # x_ref: (1, C, Lt); sum_ref: (1, C, 1) resident accumulator over the L axis.
    li = pl.program_id(1)
    x = x_ref[...].astype(jnp.float32)
    # Mask the ragged tail of the final L tile so it cannot pollute the sum.
    pos = li * tile_len + jax.lax.broadcasted_iota(jnp.int32, x.shape, 2)
    x = jnp.where(pos < seq_len, x, 0.0)
    part = jnp.sum(x, axis=-1, keepdims=True)                 # (1, C, 1)

    @pl.when(li == 0)
    def _():
        sum_ref[...] = jnp.zeros_like(sum_ref)

    sum_ref[...] += part


def _se_scale_kernel(x_ref, gate_ref, o_ref):
    # x_ref/o_ref: (1, C, Lt); gate_ref: (1, C, 1) broadcast over lanes.
    x = x_ref[...]
    o_ref[...] = x * gate_ref[...].astype(x.dtype)


# ---------------------------------------------------------------------------
# Wrapper
# ---------------------------------------------------------------------------

_BLOCK_TARGET_BYTES = {
    "v5e": 4 << 20,      # 16 MiB default scoped VMEM, 128 MiB physical
    "v6e": 8 << 20,      # 32 MiB default scoped VMEM, 128 MiB physical
    "v7x": 10 << 20,     # 64 MiB physical per-TC VMEM; stay well under
    "unknown": 4 << 20,  # conservative default
}


def _tpu_generation():
    try:
        kind = jax.devices()[0].device_kind.lower()
    except Exception:
        return "unknown"
    if "7" in kind:
        return "v7x"
    if "v6" in kind or "6e" in kind:
        return "v6e"
    if "v5" in kind and ("lite" in kind or "5e" in kind):
        return "v5e"
    return "unknown"


def se_module(x, w1, b1, w2, b2, *, max_block_bytes=None, donate_x=False):
    """SEModule forward.  x: (B, C, L).
    w1: (H, C, 1), b1: (H,), w2: (C, H, 1), b2: (C,)
    (weight shapes follow torch.nn.Conv1d(C, H, kernel_size=1))."""
    B, C, L = x.shape
    H = w1.shape[0]
    itemsize = jnp.dtype(x.dtype).itemsize

    # Glue (trace-time, free): pre-transpose the 1x1-conv weights so the kernel
    # does (Bb,C)@(C,H) and (Bb,H)@(H,C) with no in-kernel transposes.
    w1t = jnp.transpose(w1[:, :, 0]).astype(jnp.float32)      # (C, H)
    w2t = jnp.transpose(w2[:, :, 0]).astype(jnp.float32)      # (H, C)
    b1r = b1.reshape(1, H).astype(jnp.float32)
    b2r = b2.reshape(1, C).astype(jnp.float32)

    gen = _tpu_generation()
    target = (max_block_bytes if max_block_bytes is not None
              else _BLOCK_TARGET_BYTES[gen])
    bytes_per_b = C * L * itemsize
    io_alias = {0: 0} if donate_x else {}

    # ------------------------------------------------------------------
    # Single-pass path: one (Bb, C, L) slab per grid step.
    # ------------------------------------------------------------------
    if bytes_per_b <= target:
        Bb = max(1, min(B, target // bytes_per_b))
        if gen == "v7x" and B >= 2:
            # Keep grid length >= 2 so both TensorCores stream (megacore).
            Bb = min(Bb, -(-B // 2))
        grid = (pl.cdiv(B, Bb),)
        block_bytes = Bb * bytes_per_b
        # 2x double-buffered input + 2x output blocks + weights + margin.
        vmem_limit = max(4 * block_bytes + (4 << 20), 32 << 20)

        cost = pl.CostEstimate(
            flops=2 * B * C * L + 4 * B * C * H,
            transcendentals=B * C,
            bytes_accessed=2 * B * C * L * itemsize + (2 * C * H + H + C) * 4,
        )
        return pl.pallas_call(
            _se_single_pass_kernel,
            out_shape=jax.ShapeDtypeStruct((B, C, L), x.dtype),
            grid_spec=pltpu.PrefetchScalarGridSpec(
                num_scalar_prefetch=0,
                grid=grid,
                in_specs=[
                    pl.BlockSpec((Bb, C, L), lambda b: (b, 0, 0)),
                    pl.BlockSpec((C, H), lambda b: (0, 0)),
                    pl.BlockSpec((1, H), lambda b: (0, 0)),
                    pl.BlockSpec((H, C), lambda b: (0, 0)),
                    pl.BlockSpec((1, C), lambda b: (0, 0)),
                ],
                out_specs=pl.BlockSpec((Bb, C, L), lambda b: (b, 0, 0)),
            ),
            compiler_params=pltpu.CompilerParams(
                dimension_semantics=("parallel",),
                vmem_limit_bytes=vmem_limit),
            cost_estimate=cost,
            input_output_aliases=io_alias,
        )(x, w1t, b1r, w2t, b2r)

    # ------------------------------------------------------------------
    # Two-pass L-tiled fallback: the per-batch slab is too big for VMEM.
    # ------------------------------------------------------------------
    if L <= 128:
        Lt = L
    else:
        lanes = max(128, (target // (C * itemsize)) // 128 * 128)
        Lt = min(lanes, (L // 128) * 128)       # multiple of 128, <= L
    num_l = pl.cdiv(L, Lt)
    block_bytes = C * Lt * itemsize
    vmem_limit = max(4 * block_bytes + (4 << 20), 32 << 20)

    # Pass 1: per-(b, c) sums, accumulated over the "arbitrary" L axis.
    pool_kernel = functools.partial(_se_pool_sum_kernel, seq_len=L, tile_len=Lt)
    sums = pl.pallas_call(
        pool_kernel,
        out_shape=jax.ShapeDtypeStruct((B, C, 1), jnp.float32),
        grid_spec=pltpu.PrefetchScalarGridSpec(
            num_scalar_prefetch=0,
            grid=(B, num_l),
            in_specs=[pl.BlockSpec((1, C, Lt), lambda b, l: (b, 0, l))],
            out_specs=pl.BlockSpec((1, C, 1), lambda b, l: (b, 0, 0)),
        ),
        compiler_params=pltpu.CompilerParams(
            dimension_semantics=("parallel", "arbitrary"),
            vmem_limit_bytes=vmem_limit),
        cost_estimate=pl.CostEstimate(
            flops=B * C * L, transcendentals=0,
            bytes_accessed=B * C * L * itemsize + B * C * 4),
    )(x)

    # Tiny excitation MLP in plain XLA (only B*C values; not worth a kernel).
    mean = sums[:, :, 0] * (1.0 / L)                          # (B, C) f32
    h = jnp.maximum(jnp.dot(mean, w1t) + b1r, 0.0)            # (B, H)
    gate = jax.nn.sigmoid(jnp.dot(h, w2t) + b2r)              # (B, C)
    gate = gate[:, :, None]                                   # (B, C, 1)

    # Pass 2: re-stream x and apply the gate, lane-dense L tiles.
    return pl.pallas_call(
        _se_scale_kernel,
        out_shape=jax.ShapeDtypeStruct((B, C, L), x.dtype),
        grid_spec=pltpu.PrefetchScalarGridSpec(
            num_scalar_prefetch=0,
            grid=(B, num_l),
            in_specs=[
                pl.BlockSpec((1, C, Lt), lambda b, l: (b, 0, l)),
                pl.BlockSpec((1, C, 1), lambda b, l: (b, 0, 0)),
            ],
            out_specs=pl.BlockSpec((1, C, Lt), lambda b, l: (b, 0, l)),
        ),
        compiler_params=pltpu.CompilerParams(
            dimension_semantics=("parallel", "parallel"),
            vmem_limit_bytes=vmem_limit),
        cost_estimate=pl.CostEstimate(
            flops=B * C * L, transcendentals=0,
            bytes_accessed=2 * B * C * L * itemsize + B * C * 4),
        input_output_aliases=io_alias,
    )(x, gate)


def se_module_ref(x, w1, b1, w2, b2):
    """Pure-JAX reference mirroring the PyTorch SEModule forward."""
    pooled = jnp.mean(x, axis=-1, keepdims=True)                         # (B, C, 1)
    h = jnp.einsum('hc,bcl->bhl', w1[:, :, 0], pooled) + b1[None, :, None]
    h = jnp.maximum(h, 0.0)
    g = jnp.einsum('ch,bhl->bcl', w2[:, :, 0], h) + b2[None, :, None]
    g = jax.nn.sigmoid(g)
    return x * g


# TODO(synk): the rest of RSNA_CNN_1D (Conv1d k=7/k=3, BatchNorm1d, MaxPool1d,
# adaptive pools, Linear/Dropout head) is left to XLA; only the SEModule block
# (the custom recurring unit) is implemented as a Pallas kernel here.


if __name__ == "__main__":
    # Shapes matching layer1 of RSNA_CNN_1D: SEModule(64, 16) -> C=64, H=4.
    B, C, L = 2, 64, 128
    reduction = 16
    H = C // reduction

    key = jax.random.PRNGKey(0)
    kx, k1, k2, k3, k4 = jax.random.split(key, 5)

    x = jax.random.normal(kx, (B, C, L), dtype=jnp.float32)
    # Deterministic synthetic parameters (Conv1d kernel_size=1 shapes).
    w1 = jax.random.normal(k1, (H, C, 1), dtype=jnp.float32) * 0.1
    b1 = jax.random.normal(k2, (H,), dtype=jnp.float32) * 0.1
    w2 = jax.random.normal(k3, (C, H, 1), dtype=jnp.float32) * 0.1
    b2 = jax.random.normal(k4, (C,), dtype=jnp.float32) * 0.1

    # Single-pass (fits-in-VMEM) path.
    out = jax.block_until_ready(se_module(x, w1, b1, w2, b2))
    ref = se_module_ref(x, w1, b1, w2, b2)
    assert out.shape == (B, C, L)
    assert jnp.allclose(out, ref, atol=1e-5, rtol=1e-5), "single-pass mismatch"

    # Two-pass L-tiled fallback path (forced small block budget, ragged last
    # L tile exercises the in-kernel mask).
    L2 = 320
    x2 = jax.random.normal(kx, (B, C, L2), dtype=jnp.float32)
    out2 = jax.block_until_ready(
        se_module(x2, w1, b1, w2, b2, max_block_bytes=32 * 1024))
    ref2 = se_module_ref(x2, w1, b1, w2, b2)
    assert out2.shape == (B, C, L2)
    assert jnp.allclose(out2, ref2, atol=1e-5, rtol=1e-5), "two-pass mismatch"

    print("KERNEL_OK")
</pallas_src>

<mosaic_0001>
module attributes {stable_mosaic.version = 11 : i64} {
  func.func @_se_single_pass_kernel(%arg0: i32, %arg1: memref<2x64x128xf32, #tpu.memory_space<vmem>>, %arg2: memref<64x4xf32, #tpu.memory_space<vmem>>, %arg3: memref<1x4xf32, #tpu.memory_space<vmem>>, %arg4: memref<4x64xf32, #tpu.memory_space<vmem>>, %arg5: memref<1x64xf32, #tpu.memory_space<vmem>>, %arg6: memref<2x64x128xf32, #tpu.memory_space<vmem>>) attributes {dimension_semantics = [#tpu.dimension_semantics<parallel>], iteration_bounds = array<i64: 1>, scalar_prefetch = 0 : i64, scratch_operands = 0 : i64, tpu.core_type = #tpu.core_type<tc>, window_params = [{transform_indices = @transform_0, window_bounds = array<i64: 2, 64, 128>}, {pipeline_mode = #tpu.pipeline_mode<synchronous>, transform_indices = @transform_1, window_bounds = array<i64: 64, 4>}, {pipeline_mode = #tpu.pipeline_mode<synchronous>, transform_indices = @transform_2, window_bounds = array<i64: 1, 4>}, {pipeline_mode = #tpu.pipeline_mode<synchronous>, transform_indices = @transform_3, window_bounds = array<i64: 4, 64>}, {pipeline_mode = #tpu.pipeline_mode<synchronous>, transform_indices = @transform_4, window_bounds = array<i64: 1, 64>}, {transform_indices = @transform_5, window_bounds = array<i64: 2, 64, 128>}]} {
    %c0 = arith.constant 0 : index
    %c0_0 = arith.constant 0 : index
    %c0_1 = arith.constant 0 : index
    %0 = vector.load %arg1[%c0, %c0_0, %c0_1] : memref<2x64x128xf32, #tpu.memory_space<vmem>>, vector<2x64x128xf32>
    %cst = arith.constant dense<0.000000e+00> : vector<2x64xf32>
    %1 = vector.multi_reduction <add>, %0, %cst [2] : vector<2x64x128xf32> to vector<2x64xf32>
    %cst_2 = arith.constant 1.280000e+02 : f32
    %2 = vector.broadcast %cst_2 : f32 to vector<2x64xf32>
    %3 = arith.divf %1, %2 : vector<2x64xf32>
    %c0_3 = arith.constant 0 : index
    %c0_4 = arith.constant 0 : index
    %4 = vector.load %arg2[%c0_3, %c0_4] : memref<64x4xf32, #tpu.memory_space<vmem>>, vector<64x4xf32>
    %cst_5 = arith.constant dense<0.000000e+00> : vector<2x4xf32>
    %5 = tpu.matmul %3, %4, %cst_5 {dimension_numbers = #tpu.dot_dimension_numbers<[1], [0], [0], [1], [0, 0, 1, 1], [], []>} : vector<2x64xf32>, vector<64x4xf32>, vector<2x4xf32> -> vector<2x4xf32>
    %c0_6 = arith.constant 0 : index
    %c0_7 = arith.constant 0 : index
    %6 = vector.load %arg3[%c0_6, %c0_7] : memref<1x4xf32, #tpu.memory_space<vmem>>, vector<1x4xf32>
    %7 = vector.broadcast %6 : vector<1x4xf32> to vector<2x4xf32>
    %8 = arith.addf %5, %7 : vector<2x4xf32>
    %cst_8 = arith.constant 0.000000e+00 : f32
    %9 = vector.broadcast %cst_8 : f32 to vector<2x4xf32>
    %10 = arith.maximumf %8, %9 : vector<2x4xf32>
    %c0_9 = arith.constant 0 : index
    %c0_10 = arith.constant 0 : index
    %11 = vector.load %arg4[%c0_9, %c0_10] : memref<4x64xf32, #tpu.memory_space<vmem>>, vector<4x64xf32>
    %cst_11 = arith.constant dense<0.000000e+00> : vector<2x64xf32>
    %12 = tpu.matmul %10, %11, %cst_11 {dimension_numbers = #tpu.dot_dimension_numbers<[1], [0], [0], [1], [0, 0, 1, 1], [], []>} : vector<2x4xf32>, vector<4x64xf32>, vector<2x64xf32> -> vector<2x64xf32>
    %c0_12 = arith.constant 0 : index
    %c0_13 = arith.constant 0 : index
    %13 = vector.load %arg5[%c0_12, %c0_13] : memref<1x64xf32, #tpu.memory_space<vmem>>, vector<1x64xf32>
    %14 = vector.broadcast %13 : vector<1x64xf32> to vector<2x64xf32>
    %15 = arith.addf %12, %14 : vector<2x64xf32>
    %16 = arith.negf %15 : vector<2x64xf32>
    %17 = math.exp %16 : vector<2x64xf32>
    %cst_14 = arith.constant 1.000000e+00 : f32
    %18 = vector.broadcast %cst_14 : f32 to vector<2x64xf32>
    %19 = arith.addf %18, %17 : vector<2x64xf32>
    %20 = arith.divf %18, %19 : vector<2x64xf32>
    %21 = vector.shape_cast %20 : vector<2x64xf32> to vector<2x64x1xf32>
    %22 = vector.broadcast %21 : vector<2x64x1xf32> to vector<2x64x128xf32>
    %23 = arith.mulf %0, %22 : vector<2x64x128xf32>
    %c0_15 = arith.constant 0 : index
    %c0_16 = arith.constant 0 : index
    %c0_17 = arith.constant 0 : index
    %24 = vector.load %arg6[%c0_15, %c0_16, %c0_17] : memref<2x64x128xf32, #tpu.memory_space<vmem>>, vector<2x64x128xf32>
    tpu.vector_store %arg6[%c0_15, %c0_16, %c0_17], %23 {strides = array<i32>} : memref<2x64x128xf32, #tpu.memory_space<vmem>>, vector<2x64x128xf32>,
    return
  }
  func.func @transform_0(%arg0: i32) -> (i32, i32, i32) {
    %c0_i32 = arith.constant 0 : i32
    %c0_i32_0 = arith.constant 0 : i32
    %c0_i32_1 = arith.constant 0 : i32
    return %arg0, %c0_i32, %c0_i32_0 : i32, i32, i32
  }
  func.func @transform_1(%arg0: i32) -> (i32, i32) {
    %c0_i32 = arith.constant 0 : i32
    %c0_i32_0 = arith.constant 0 : i32
    %c0_i32_1 = arith.constant 0 : i32
    return %c0_i32, %c0_i32_0 : i32, i32
  }
  func.func @transform_2(%arg0: i32) -> (i32, i32) {
    %c0_i32 = arith.constant 0 : i32
    %c0_i32_0 = arith.constant 0 : i32
    %c0_i32_1 = arith.constant 0 : i32
    return %c0_i32, %c0_i32_0 : i32, i32
  }
  func.func @transform_3(%arg0: i32) -> (i32, i32) {
    %c0_i32 = arith.constant 0 : i32
    %c0_i32_0 = arith.constant 0 : i32
    %c0_i32_1 = arith.constant 0 : i32
    return %c0_i32, %c0_i32_0 : i32, i32
  }
  func.func @transform_4(%arg0: i32) -> (i32, i32) {
    %c0_i32 = arith.constant 0 : i32
    %c0_i32_0 = arith.constant 0 : i32
    %c0_i32_1 = arith.constant 0 : i32
    return %c0_i32, %c0_i32_0 : i32, i32
  }
  func.func @transform_5(%arg0: i32) -> (i32, i32, i32) {
    %c0_i32 = arith.constant 0 : i32
    %c0_i32_0 = arith.constant 0 : i32
    %c0_i32_1 = arith.constant 0 : i32
    return %arg0, %c0_i32, %c0_i32_0 : i32, i32, i32
  }
}

</mosaic_0001>

<llo_original>
// kernel: tpu_custom_call.1
$region0: #{tpu_custom_call.1}
  #allocation0 [shape = 'u32[]', space=smem, size = 0x4, offset = 0x4, fixed_abs, tag = 'smem constant byte address 0x4 - core index']
  #allocation1 [shape = 'u32[144,128]{1,0:T(1,128)}', space=vmem, size = 0x12000, scoped, tag = 'internal scratch']
  %s0 = inlined_call_operand.hbm [shape: f32[2,64,128], index: 0, kind: input, shape index: {}]
  %s1 = inlined_call_operand.vmem [shape: f32[64,4], index: 1, kind: input, shape index: {}]
  %s2 = inlined_call_operand.vmem [shape: f32[1,4], index: 2, kind: input, shape index: {}]
  %s3 = inlined_call_operand.vmem [shape: f32[4,64], index: 3, kind: input, shape index: {}]
  %s4 = inlined_call_operand.vmem [shape: f32[1,64], index: 4, kind: input, shape index: {}]
  %s5 = inlined_call_operand.hbm [shape: f32[2,64,128], index: 5, kind: output, shape index: {}]
  %s6 = sld [smem:[#allocation0]]
  $region34: #{tpu_custom_call.1} parent=0
    _
  %s8 = ssub.s32 1, %s6
  %s9 = scalar_select 0, %s8, %s6
  $region1: #{tpu_custom_call.1} parent=0
    #allocation2 [shape = 'u8[65536]{0}', space=vmem, size = 0x10000, scoped, tag = 'input window, operand 0, single buffered']
    #allocation3 [shape = 's32[1]{0}', space=sflag, size = 0x4, scoped, tag = 'scoped memory for tpu_custom_call.1']
    #allocation4 [shape = 's32[1]{0}', space=sflag, size = 0x4, scoped, tag = 'scoped memory for tpu_custom_call.1']
    #allocation5 [shape = 'u8[65536]{0}', space=vmem, size = 0x10000, scoped, tag = 'output window, operand 0, single buffered']
    %10 = vsyncpa [#allocation3], 0
    %11 = vsyncpa [#allocation4], 0
    // Predicated region
    $region2: #{tpu_custom_call.1} parent=1 // pred_check
      _
    $region3: #{tpu_custom_call.1} parent=1 // pred_check_branch
      %13 = sbr.rel (0) target = $region5
    $region4: #{tpu_custom_call.1} parent=1 // pred_region
      %s15 = ssub.s32 2048, 2048
      %16 = vsyncadd [#allocation3], %s15
      %s17 = sshll.u32 [#allocation2], 4
      %s18 = int_to_ptr.vmem [resolvable:$true] %s17
      %23 = dma.hbm_to_vmem [thread:$0]  %s0, 2048, %s18, [#allocation3], 128, 128, 8
    $region5: #{tpu_custom_call.1} parent=1 // pred_fallthru
      _
    // Predicated region
    $region6: #{tpu_custom_call.1} parent=1 // pred_check
      _
    $region7: #{tpu_custom_call.1} parent=1 // pred_check_branch
      %25 = sbr.rel (0) target = $region9
    $region8: #{tpu_custom_call.1} parent=1 // pred_region
      _
    $region9: #{tpu_custom_call.1} parent=1 // pred_fallthru
      _
    // Predicated region
    $region10: #{tpu_custom_call.1} parent=1 // pred_check
      _
    $region11: #{tpu_custom_call.1} parent=1 // pred_check_branch
      %27 = sbr.rel (0) target = $region13
    $region12: #{tpu_custom_call.1} parent=1 // pred_region
      _
    $region13: #{tpu_custom_call.1} parent=1 // pred_fallthru
      _
    // Predicated region
    $region14: #{tpu_custom_call.1} parent=1 // pred_check
      _
    $region15: #{tpu_custom_call.1} parent=1 // pred_check_branch
      %29 = sbr.rel (0) target = $region17
    $region16: #{tpu_custom_call.1} parent=1 // pred_region
      _
    $region17: #{tpu_custom_call.1} parent=1 // pred_fallthru
      _
    // Predicated region
    $region18: #{tpu_custom_call.1} parent=1 // pred_check
      _
    $region19: #{tpu_custom_call.1} parent=1 // pred_check_branch
      %31 = sbr.rel (0) target = $region21
    $region20: #{tpu_custom_call.1} parent=1 // pred_region
      _
    $region21: #{tpu_custom_call.1} parent=1 // pred_fallthru
      _
    // Predicated region
    $region22: #{tpu_custom_call.1} parent=1 // pred_check
      _
    $region23: #{tpu_custom_call.1} parent=1 // pred_check_branch
      %33 = sbr.rel (0) target = $region25
    $region24: #{tpu_custom_call.1} parent=1 // pred_region
      %34 = dma.done [#allocation3], 2048
    $region25: #{tpu_custom_call.1} parent=1 // pred_fallthru
      _
    %v35 = vld [vmem:[#allocation2] sm:$0xff]
    %v36 = vld [vmem:[#allocation2 + $0x8] sm:$0xff]
    %v37 = vld [vmem:[#allocation2 + $0x10] sm:$0xff]
    %v38 = vld [vmem:[#allocation2 + $0x18] sm:$0xff]
    %v39 = vld [vmem:[#allocation2 + $0x20] sm:$0xff]
    %v40 = vld [vmem:[#allocation2 + $0x28] sm:$0xff]
    %v41 = vld [vmem:[#allocation2 + $0x30] sm:$0xff]
    %v42 = vld [vmem:[#allocation2 + $0x38] sm:$0xff]
    %v43 = vld [vmem:[#allocation2 + $0x40] sm:$0xff]
    %v44 = vld [vmem:[#allocation2 + $0x48] sm:$0xff]
    %v45 = vld [vmem:[#allocation2 + $0x50] sm:$0xff]
    %v46 = vld [vmem:[#allocation2 + $0x58] sm:$0xff]
    %v47 = vld [vmem:[#allocation2 + $0x60] sm:$0xff]
    %v48 = vld [vmem:[#allocation2 + $0x68] sm:$0xff]
    %v49 = vld [vmem:[#allocation2 + $0x70] sm:$0xff]
    %v50 = vld [vmem:[#allocation2 + $0x78] sm:$0xff]
    %51 = vadd.xlane.f32.xlu0 %v35
    %v52 = vpop.xlane.xlu0 %51
    %53 = vadd.xlane.f32.xlu0 %v36
    %v54 = vpop.xlane.xlu0 %53
    %55 = vadd.xlane.f32.xlu0 %v37
    %v56 = vpop.xlane.xlu0 %55
    %57 = vadd.xlane.f32.xlu0 %v38
    %v58 = vpop.xlane.xlu0 %57
    %59 = vadd.xlane.f32.xlu0 %v39
    %v60 = vpop.xlane.xlu0 %59
    %61 = vadd.xlane.f32.xlu0 %v40
    %v62 = vpop.xlane.xlu0 %61
    %63 = vadd.xlane.f32.xlu0 %v41
    %v64 = vpop.xlane.xlu0 %63
    %65 = vadd.xlane.f32.xlu0 %v42
    %v66 = vpop.xlane.xlu0 %65
    %67 = vadd.xlane.f32.xlu0 %v43
    %v68 = vpop.xlane.xlu0 %67
    %69 = vadd.xlane.f32.xlu0 %v44
    %v70 = vpop.xlane.xlu0 %69
    %71 = vadd.xlane.f32.xlu0 %v45
    %v72 = vpop.xlane.xlu0 %71
    %73 = vadd.xlane.f32.xlu0 %v46
    %v74 = vpop.xlane.xlu0 %73
    %75 = vadd.xlane.f32.xlu0 %v47
    %v76 = vpop.xlane.xlu0 %75
    %77 = vadd.xlane.f32.xlu0 %v48
    %v78 = vpop.xlane.xlu0 %77
    %79 = vadd.xlane.f32.xlu0 %v49
    %v80 = vpop.xlane.xlu0 %79
    %81 = vadd.xlane.f32.xlu0 %v50
    %v82 = vpop.xlane.xlu0 %81
    %v83 = vrcp.pop 128.0
    %v84 = vmul.f32 %v52, %v83
    %v85 = vmul.f32 %v54, %v83
    %v86 = vmul.f32 %v56, %v83
    %v87 = vmul.f32 %v58, %v83
    %v88 = vmul.f32 %v60, %v83
    %v89 = vmul.f32 %v62, %v83
    %v90 = vmul.f32 %v64, %v83
    %v91 = vmul.f32 %v66, %v83
    %v92 = vmul.f32 %v68, %v83
    %v93 = vmul.f32 %v70, %v83
    %v94 = vmul.f32 %v72, %v83
    %v95 = vmul.f32 %v74, %v83
    %v96 = vmul.f32 %v76, %v83
    %v97 = vmul.f32 %v78, %v83
    %v98 = vmul.f32 %v80, %v83
    %v99 = vmul.f32 %v82, %v83
    %v100 = vld [vmem:[%s1] sm:$0xff]
    %v101 = vld [vmem:[%s1 + $0x8] sm:$0xff]
    %v102 = vld [vmem:[%s1 + $0x10] sm:$0xff]
    %v103 = vld [vmem:[%s1 + $0x18] sm:$0xff]
    %v104 = vld [vmem:[%s1 + $0x20] sm:$0xff]
    %v105 = vld [vmem:[%s1 + $0x28] sm:$0xff]
    %v106 = vld [vmem:[%s1 + $0x30] sm:$0xff]
    %v107 = vld [vmem:[%s1 + $0x38] sm:$0xff]
    %v108 = vld [vmem:[%s2] sm:$0x1]
    %v110 = vlaneseq
    %v111 = vshrl.u32 %v110, 7
    %v112 = vsub.s32 0, %v111
    %v113 = vrot.slane %v108, %v112
    %v131 = vlaneseq
    %v132 = vand.u32 %v131, 127
    %v133 = vlaneseq
    %v134 = vshrl.u32 %v133, 7
    %v135 = vsub.s32 %v132, %v134
    %v136 = vrot.slane %v84, %v135
    %v137 = vadd.s32 %v132, 4294967288
    %v138 = vlaneseq
    %v139 = vshrl.u32 %v138, 7
    %v140 = vsub.s32 %v137, %v139
    %v141 = vrot.slane %v85, %v140
    %vm142 = vcmask 130112
    %v143 = vsel %vm142, %v141, %v136
    %v144 = vadd.s32 %v132, 4294967280
    %v145 = vlaneseq
    %v146 = vshrl.u32 %v145, 7
    %v147 = vsub.s32 %v144, %v146
    %v148 = vrot.slane %v86, %v147
    %vm149 = vcmask 195712
    %v150 = vsel %vm149, %v148, %v143
    %v151 = vadd.s32 %v132, 4294967272
    %v152 = vlaneseq
    %v153 = vshrl.u32 %v152, 7
    %v154 = vsub.s32 %v151, %v153
    %v155 = vrot.slane %v87, %v154
    %vm156 = vcmask 261312
    %v157 = vsel %vm156, %v155, %v150
    %v158 = vadd.s32 %v132, 4294967264
    %v159 = vlaneseq
    %v160 = vshrl.u32 %v159, 7
    %v161 = vsub.s32 %v158, %v160
    %v162 = vrot.slane %v88, %v161
    %vm163 = vcmask 326912
    %v164 = vsel %vm163, %v162, %v157
    %v165 = vadd.s32 %v132, 4294967256
    %v166 = vlaneseq
    %v167 = vshrl.u32 %v166, 7
    %v168 = vsub.s32 %v165, %v167
    %v169 = vrot.slane %v89, %v168
    %vm170 = vcmask 392512
    %v171 = vsel %vm170, %v169, %v164
    %v172 = vadd.s32 %v132, 4294967248
    %v173 = vlaneseq
    %v174 = vshrl.u32 %v173, 7
    %v175 = vsub.s32 %v172, %v174
    %v176 = vrot.slane %v90, %v175
    %vm177 = vcmask 458112
    %v178 = vsel %vm177, %v176, %v171
    %v179 = vadd.s32 %v132, 4294967240
    %v180 = vlaneseq
    %v181 = vshrl.u32 %v180, 7
    %v182 = vsub.s32 %v179, %v181
    %v183 = vrot.slane %v91, %v182
    %vm184 = vcmask 523712
    %v185 = vsel %vm184, %v183, %v178
    %v186 = vlaneseq
    %v187 = vshrl.u32 %v186, 7
    %v188 = vsub.s32 %v132, %v187
    %v189 = vrot.slane %v92, %v188
    %v190 = vlaneseq
    %v191 = vshrl.u32 %v190, 7
    %v192 = vsub.s32 %v137, %v191
    %v193 = vrot.slane %v93, %v192
    %v194 = vsel %vm142, %v193, %v189
    %v195 = vlaneseq
    %v196 = vshrl.u32 %v195, 7
    %v197 = vsub.s32 %v144, %v196
    %v198 = vrot.slane %v94, %v197
    %v199 = vsel %vm149, %v198, %v194
    %v200 = vlaneseq
    %v201 = vshrl.u32 %v200, 7
    %v202 = vsub.s32 %v151, %v201
    %v203 = vrot.slane %v95, %v202
    %v204 = vsel %vm156, %v203, %v199
    %v205 = vlaneseq
    %v206 = vshrl.u32 %v205, 7
    %v207 = vsub.s32 %v158, %v206
    %v208 = vrot.slane %v96, %v207
    %v209 = vsel %vm163, %v208, %v204
    %v210 = vlaneseq
    %v211 = vshrl.u32 %v210, 7
    %v212 = vsub.s32 %v165, %v211
    %v213 = vrot.slane %v97, %v212
    %v214 = vsel %vm170, %v213, %v209
    %v215 = vlaneseq
    %v216 = vshrl.u32 %v215, 7
    %v217 = vsub.s32 %v172, %v216
    %v218 = vrot.slane %v98, %v217
    %v219 = vsel %vm177, %v218, %v214
    %v220 = vlaneseq
    %v221 = vshrl.u32 %v220, 7
    %v222 = vsub.s32 %v179, %v221
    %v223 = vrot.slane %v99, %v222
    %v224 = vsel %vm184, %v223, %v219
    %vm225 = vcmask 1041409
    %v226 = vsel %vm225, %v224, %v185
    %vm227 = vcmask 523264
    %v228 = vsel %vm227, %v226, 0
    %230 = vmatprep.subr.mxu0 0.0
    %231 = vmatpush1.msra.mxu0 %v100
    %232 = vmatprep.subr.mxu0 0.0
    %233 = vmatpush1.msra.mxu0 %v101
    %234 = vmatprep.subr.mxu0 0.0
    %235 = vmatpush1.msra.mxu0 %v102
    %236 = vmatprep.subr.mxu0 0.0
    %237 = vmatpush1.msra.mxu0 %v103
    %238 = vmatprep.subr.mxu0 0.0
    %239 = vmatpush1.msra.mxu0 %v104
    %240 = vmatprep.subr.mxu0 0.0
    %241 = vmatpush1.msra.mxu0 %v105
    %242 = vmatprep.subr.mxu0 0.0
    %243 = vmatpush1.msra.mxu0 %v106
    %244 = vmatprep.subr.mxu0 0.0
    %245 = vmatpush1.msra.mxu0 %v107
    %246 = vmatprep.subr.mxu0 0.0
    %247 = vmatpush1.msra.mxu0 0.0
    %248 = vmatprep.subr.mxu0 0.0
    %249 = vmatpush1.msra.mxu0 0.0
    %250 = vmatprep.subr.mxu0 0.0
    %251 = vmatpush1.msra.mxu0 0.0
    %252 = vmatprep.subr.mxu0 0.0
    %253 = vmatpush1.msra.mxu0 0.0
    %254 = vmatprep.subr.mxu0 0.0
    %255 = vmatpush1.msra.mxu0 0.0
    %256 = vmatprep.subr.mxu0 0.0
    %257 = vmatpush1.msra.mxu0 0.0
    %258 = vmatprep.subr.mxu0 0.0
    %259 = vmatpush1.msra.mxu0 0.0
    %260 = vmatprep.subr.mxu0 0.0
    %261 = vmatpush1.msra.mxu0 0.0
    %262 = vmatprep.subr.mxu0 0.0
    %263 = vmatpush1.msra.mxu0 0.0
    %264 = vmatprep.subr.mxu0 0.0
    %265 = vmatpush1.msra.mxu0 0.0
    %266 = vmatprep.subr.mxu0 0.0
    %267 = vmatpush1.msra.mxu0 0.0
    %268 = vmatprep.subr.mxu0 0.0
    %269 = vmatpush1.msra.mxu0 0.0
    %270 = vmatprep.subr.mxu0 0.0
    %271 = vmatpush1.msra.mxu0 0.0
    %272 = vmatprep.subr.mxu0 0.0
    %273 = vmatpush1.msra.mxu0 0.0
    %274 = vmatprep.subr.mxu0 0.0
    %275 = vmatpush1.msra.mxu0 0.0
    %276 = vmatprep.subr.mxu0 0.0
    %277 = vmatpush1.msra.mxu0 0.0
    %278 = vmatprep.subr.mxu0 0.0
    %279 = vmatpush1.msra.mxu0 0.0
    %280 = vmatprep.subr.mxu0 0.0
    %281 = vmatpush1.msra.mxu0 0.0
    %282 = vmatprep.subr.mxu0 0.0
    %283 = vmatpush1.msra.mxu0 0.0
    %284 = vmatprep.subr.mxu0 0.0
    %285 = vmatpush1.msra.mxu0 0.0
    %286 = vmatprep.subr.mxu0 0.0
    %287 = vmatpush1.msra.mxu0 0.0
    %288 = vmatprep.subr.mxu0 0.0
    %289 = vmatpush1.msra.mxu0 0.0
    %290 = vmatprep.subr.mxu0 0.0
    %291 = vmatpush1.msra.mxu0 0.0
    %292 = vmatprep.subr.mxu0 0.0
    %293 = vmatpush1.msra.mxu0 0.0
    %294 = vmatprep.mubr.f32.mxu0 0.0
    %295 = vmatmul.mubr.f32.gmra.mrb[0].mxu0 %v228
    %v296 = vpop.f32.mrb[0].mxu0
    %v297 = vadd.f32 %v113, %v296
    %v298 = vpop.f32.mrb[0].mxu0
    %299 = vdwg.mxu0
    %v300 = vmax.f32 %v297, 0.0
    %v301 = vld [vmem:[%s3] sm:$0xf]
    %v302 = vld [vmem:[%s4] sm:$0x1]
    %v304 = vlaneseq
    %v305 = vshrl.u32 %v304, 7
    %v306 = vsub.s32 0, %v305
    %v307 = vrot.slane %v302, %v306
    %vm309 = vcmask 31744
    %v311 = vsel %vm309, %v300, 0
    %vm313 = vcmask 1043456
    %v315 = vsel %vm313, %v301, 0
    %317 = vmatprep.subr.mxu0 0.0
    %318 = vmatpush1.msra.mxu0 %v315
    %319 = vmatprep.subr.mxu0 0.0
    %320 = vmatpush1.msra.mxu0 0.0
    %321 = vmatprep.subr.mxu0 0.0
    %322 = vmatpush1.msra.mxu0 0.0
    %323 = vmatprep.subr.mxu0 0.0
    %324 = vmatpush1.msra.mxu0 0.0
    %325 = vmatprep.subr.mxu0 0.0
    %326 = vmatpush1.msra.mxu0 0.0
    %327 = vmatprep.subr.mxu0 0.0
    %328 = vmatpush1.msra.mxu0 0.0
    %329 = vmatprep.subr.mxu0 0.0
    %330 = vmatpush1.msra.mxu0 0.0
    %331 = vmatprep.subr.mxu0 0.0
    %332 = vmatpush1.msra.mxu0 0.0
    %333 = vmatprep.subr.mxu0 0.0
    %334 = vmatpush1.msra.mxu0 0.0
    %335 = vmatprep.subr.mxu0 0.0
    %336 = vmatpush1.msra.mxu0 0.0
    %337 = vmatprep.subr.mxu0 0.0
    %338 = vmatpush1.msra.mxu0 0.0
    %339 = vmatprep.subr.mxu0 0.0
    %340 = vmatpush1.msra.mxu0 0.0
    %341 = vmatprep.subr.mxu0 0.0
    %342 = vmatpush1.msra.mxu0 0.0
    %343 = vmatprep.subr.mxu0 0.0
    %344 = vmatpush1.msra.mxu0 0.0
    %345 = vmatprep.subr.mxu0 0.0
    %346 = vmatpush1.msra.mxu0 0.0
    %347 = vmatprep.subr.mxu0 0.0
    %348 = vmatpush1.msra.mxu0 0.0
    %349 = vmatprep.subr.mxu0 0.0
    %350 = vmatpush1.msra.mxu0 0.0
    %351 = vmatprep.subr.mxu0 0.0
    %352 = vmatpush1.msra.mxu0 0.0
    %353 = vmatprep.subr.mxu0 0.0
    %354 = vmatpush1.msra.mxu0 0.0
    %355 = vmatprep.subr.mxu0 0.0
    %356 = vmatpush1.msra.mxu0 0.0
    %357 = vmatprep.subr.mxu0 0.0
    %358 = vmatpush1.msra.mxu0 0.0
    %359 = vmatprep.subr.mxu0 0.0
    %360 = vmatpush1.msra.mxu0 0.0
    %361 = vmatprep.subr.mxu0 0.0
    %362 = vmatpush1.msra.mxu0 0.0
    %363 = vmatprep.subr.mxu0 0.0
    %364 = vmatpush1.msra.mxu0 0.0
    %365 = vmatprep.subr.mxu0 0.0
    %366 = vmatpush1.msra.mxu0 0.0
    %367 = vmatprep.subr.mxu0 0.0
    %368 = vmatpush1.msra.mxu0 0.0
    %369 = vmatprep.subr.mxu0 0.0
    %370 = vmatpush1.msra.mxu0 0.0
    %371 = vmatprep.subr.mxu0 0.0
    %372 = vmatpush1.msra.mxu0 0.0
    %373 = vmatprep.subr.mxu0 0.0
    %374 = vmatpush1.msra.mxu0 0.0
    %375 = vmatprep.subr.mxu0 0.0
    %376 = vmatpush1.msra.mxu0 0.0
    %377 = vmatprep.subr.mxu0 0.0
    %378 = vmatpush1.msra.mxu0 0.0
    %379 = vmatprep.subr.mxu0 0.0
    %380 = vmatpush1.msra.mxu0 0.0
    %381 = vmatprep.mubr.f32.mxu0 0.0
    %382 = vmatmul.mubr.f32.gmra.mrb[0].mxu0 %v311
    %v383 = vpop.f32.mrb[0].mxu0
    %v384 = vadd.f32 %v307, %v383
    %v385 = vpop.f32.mrb[0].mxu0
    %386 = vdwg.mxu0
    %v387 = vxor.u32 %v384, 2147483648
    %v388 = vmul.f32 %v387, 1.442695
    %v389 = vpow.pop %v388
    %v390 = vadd.f32 %v389, 1.0
    %v391 = vrcp.pop %v390
    %v392 = vmul.f32 1.0, %v391
    %v393 = vlaneseq
    %v394 = vshrl.u32 %v393, 7
    %v395 = vsub.s32 0, %v394
    %v396 = vrot.slane %v392, %v395
    %398 = vbcast.lane.b32.xlu0 %v396, 256
    %v399 = vpop.permute.xlu0 %398
    %s401 = sor.u32 256, 8
    %402 = vbcast.lane.b32.xlu0 %v396, %s401
    %v403 = vpop.permute.xlu0 %402
    %s405 = sor.u32 256, 16
    %406 = vbcast.lane.b32.xlu0 %v396, %s405
    %v407 = vpop.permute.xlu0 %406
    %s409 = sor.u32 256, 24
    %410 = vbcast.lane.b32.xlu0 %v396, %s409
    %v411 = vpop.permute.xlu0 %410
    %s413 = sor.u32 256, 32
    %414 = vbcast.lane.b32.xlu0 %v396, %s413
    %v415 = vpop.permute.xlu0 %414
    %s417 = sor.u32 256, 40
    %418 = vbcast.lane.b32.xlu0 %v396, %s417
    %v419 = vpop.permute.xlu0 %418
    %s421 = sor.u32 256, 48
    %422 = vbcast.lane.b32.xlu0 %v396, %s421
    %v423 = vpop.permute.xlu0 %422
    %s425 = sor.u32 256, 56
    %426 = vbcast.lane.b32.xlu0 %v396, %s425
    %v427 = vpop.permute.xlu0 %426
    %v428 = vlaneseq
    %v429 = vshrl.u32 %v428, 7
    %v430 = vsub.s32 1, %v429
    %v431 = vrot.slane %v392, %v430
    %433 = vbcast.lane.b32.xlu0 %v431, 256
    %v434 = vpop.permute.xlu0 %433
    %s436 = sor.u32 256, 8
    %437 = vbcast.lane.b32.xlu0 %v431, %s436
    %v438 = vpop.permute.xlu0 %437
    %s440 = sor.u32 256, 16
    %441 = vbcast.lane.b32.xlu0 %v431, %s440
    %v442 = vpop.permute.xlu0 %441
    %s444 = sor.u32 256, 24
    %445 = vbcast.lane.b32.xlu0 %v431, %s444
    %v446 = vpop.permute.xlu0 %445
    %s448 = sor.u32 256, 32
    %449 = vbcast.lane.b32.xlu0 %v431, %s448
    %v450 = vpop.permute.xlu0 %449
    %s452 = sor.u32 256, 40
    %453 = vbcast.lane.b32.xlu0 %v431, %s452
    %v454 = vpop.permute.xlu0 %453
    %s456 = sor.u32 256, 48
    %457 = vbcast.lane.b32.xlu0 %v431, %s456
    %v458 = vpop.permute.xlu0 %457
    %s460 = sor.u32 256, 56
    %461 = vbcast.lane.b32.xlu0 %v431, %s460
    %v462 = vpop.permute.xlu0 %461
    %v463 = vmul.f32 %v35, %v399
    %v464 = vmul.f32 %v36, %v403
    %v465 = vmul.f32 %v37, %v407
    %v466 = vmul.f32 %v38, %v411
    %v467 = vmul.f32 %v39, %v415
    %v468 = vmul.f32 %v40, %v419
    %v469 = vmul.f32 %v41, %v423
    %v470 = vmul.f32 %v42, %v427
    %v471 = vmul.f32 %v43, %v434
    %v472 = vmul.f32 %v44, %v438
    %v473 = vmul.f32 %v45, %v442
    %v474 = vmul.f32 %v46, %v446
    %v475 = vmul.f32 %v47, %v450
    %v476 = vmul.f32 %v48, %v454
    %v477 = vmul.f32 %v49, %v458
    %v478 = vmul.f32 %v50, %v462
    %479 = vst [vmem:[#allocation5] sm:$0xff] %v463
    %480 = vst [vmem:[#allocation5 + $0x8] sm:$0xff] %v464
    %481 = vst [vmem:[#allocation5 + $0x10] sm:$0xff] %v465
    %482 = vst [vmem:[#allocation5 + $0x18] sm:$0xff] %v466
    %483 = vst [vmem:[#allocation5 + $0x20] sm:$0xff] %v467
    %484 = vst [vmem:[#allocation5 + $0x28] sm:$0xff] %v468
    %485 = vst [vmem:[#allocation5 + $0x30] sm:$0xff] %v469
    %486 = vst [vmem:[#allocation5 + $0x38] sm:$0xff] %v470
    %487 = vst [vmem:[#allocation5 + $0x40] sm:$0xff] %v471
    %488 = vst [vmem:[#allocation5 + $0x48] sm:$0xff] %v472
    %489 = vst [vmem:[#allocation5 + $0x50] sm:$0xff] %v473
    %490 = vst [vmem:[#allocation5 + $0x58] sm:$0xff] %v474
    %491 = vst [vmem:[#allocation5 + $0x60] sm:$0xff] %v475
    %492 = vst [vmem:[#allocation5 + $0x68] sm:$0xff] %v476
    %493 = vst [vmem:[#allocation5 + $0x70] sm:$0xff] %v477
    %494 = vst [vmem:[#allocation5 + $0x78] sm:$0xff] %v478
    // Predicated region
    $region26: #{tpu_custom_call.1} parent=1 // pred_check
      _
    $region27: #{tpu_custom_call.1} parent=1 // pred_check_branch
      %496 = sbr.rel (0) target = $region29
    $region28: #{tpu_custom_call.1} parent=1 // pred_region
      %s498 = ssub.s32 2048, 2048
      %499 = vsyncadd [#allocation4], %s498
      %s500 = sshll.u32 [#allocation5], 4
      %s501 = int_to_ptr.vmem [resolvable:$true] %s500
      %506 = dma.vmem_to_hbm [thread:$0]  %s501, 2048, %s5, [#allocation4], 128, 128, 8
    $region29: #{tpu_custom_call.1} parent=1 // pred_fallthru
      _
    // Predicated region
    $region30: #{tpu_custom_call.1} parent=1 // pred_check
      _
    $region31: #{tpu_custom_call.1} parent=1 // pred_check_branch
      %508 = sbr.rel (0) target = $region33
    $region32: #{tpu_custom_call.1} parent=1 // pred_region
      %509 = dma.done [#allocation4], 2048
    $region33: #{tpu_custom_call.1} parent=1 // pred_fallthru
      _
    %510 = vsyncpa [#allocation3], 1
    %511 = vsyncpa [#allocation4], 1

</llo_original>
